<compile_context>
chip_gen: v6e
topology: v6e:2x2x1
jax: 0.10.0
libtpu: 0.0.40
codegen_flags: <defaults>
</compile_context>

<pallas_src>
import functools

import jax
import jax.numpy as jnp
from jax.experimental import pallas as pl
from jax.experimental.pallas import tpu as pltpu


def _round_up(x: int, m: int) -> int:
    return ((x + m - 1) // m) * m


def _sublane_tile(dtype) -> int:
    # Native packed sublane height: (8,128) f32, (16,128) bf16/f16, (32,128) int8/fp8.
    return {4: 8, 2: 16, 1: 32}.get(jnp.dtype(dtype).itemsize, 8)


def _distill_kl_kernel(y_s_ref, y_t_ref, out_ref, *, inv_T: float,
                       batch: int, block_rows: int, mask_rows: bool):
    # One (TB, C) tile of each logit tensor; upcast to f32 for VPU/EUP
    # (required on v5e anyway; bf16 inputs halve HBM read traffic).
    s = y_s_ref[...].astype(jnp.float32) * inv_T
    t = y_t_ref[...].astype(jnp.float32) * inv_T

    # Softmax statistics along the class axis (axis 1). The axis-1 reductions
    # stay per-row, so they lower to VALU partial accumulation + one final
    # 128-lane XLU reduce per vreg column.
    s_max = jnp.max(s, axis=1, keepdims=True)                    # (TB, 1)
    t_max = jnp.max(t, axis=1, keepdims=True)                    # (TB, 1)
    s_exp = jnp.exp(s - s_max)                                   # (TB, C)
    t_exp = jnp.exp(t - t_max)                                   # (TB, C)
    s_sum = jnp.sum(s_exp, axis=1, keepdims=True)                # (TB, 1)
    t_sum = jnp.sum(t_exp, axis=1, keepdims=True)                # (TB, 1)

    # Folded KL weight:
    #   log_p_t - log_p_s = (t - t_max - log t_sum) - (s - s_max - log s_sum)
    #                     = (t - s) + row_const
    # with the per-row (TB,1) scalar row_const; log_p_s is never materialized.
    row_const = (s_max - t_max) + (jnp.log(s_sum) - jnp.log(t_sum))
    w = t_exp * ((t - s) + row_const)                            # (TB, C)
    # Per-row KL; reciprocal only on TB row values, not TB*C elements.
    row = jnp.sum(w, axis=1, keepdims=True) * pl.reciprocal(t_sum, approx=False)

    if mask_rows:
        # Zero the contribution of rows beyond the true batch size in the
        # last partial tile (replaces the old jnp.pad HBM copies).
        row_ids = (pl.program_id(0) * block_rows
                   + jax.lax.broadcasted_iota(jnp.int32, row.shape, 0))
        row = jnp.where(row_ids < batch, row, 0.0)

    # Lane-dense (8,128) partial-sum block; the wrapper reads [:, 0, 0].
    out_ref[...] = jnp.broadcast_to(jnp.sum(row), out_ref.shape)


def distill_kl(y_s: jax.Array, y_t: jax.Array, T: float, *,
               block_rows=None, vmem_limit_bytes=None) -> jax.Array:
    """Pallas TPU implementation of DistillKL.forward. Returns a scalar."""
    assert y_s.shape == y_t.shape and y_s.ndim == 2
    B, C = y_s.shape
    itemsize = jnp.dtype(y_s.dtype).itemsize
    sub = _sublane_tile(y_s.dtype)

    if vmem_limit_bytes is None:
        # Generation-aware scoped-VMEM budget: ~3/4 of physical per-core VMEM
        # (128 MiB v5e/v6e, 64 MiB per-TC v7x), capped at 96 MiB.
        try:
            cap = int(pltpu.get_tpu_info().vmem_capacity_bytes)
        except Exception:
            cap = 64 * 1024 * 1024  # conservative fallback (v7x per-TC physical)
        vmem_limit_bytes = max(32 * 1024 * 1024,
                               min(cap * 3 // 4, 96 * 1024 * 1024))
    vmem_limit_bytes = int(vmem_limit_bytes)

    if block_rows is None:
        # Working set per grid step: 2 inputs x 2 pipeline buffers (input
        # dtype) + ~4 (TB, C) f32 temporaries; keep it <= ~60% of the scoped
        # limit so big tiles amortize the ~0.35 us/grid-step overhead.
        bytes_per_row = max(C, 1) * (4 * itemsize + 16)
        block_rows = max(sub, (6 * vmem_limit_bytes // 10) // bytes_per_row)

    if B <= sub:
        # Single block covering the whole array (block dims == array dims).
        tb = B
    else:
        tb = int(min(max(int(block_rows), sub), _round_up(B, sub)))
        tb = max(sub, (tb // sub) * sub)
        if pl.cdiv(B, tb) < 2:
            # v7x has 2 TensorCores: ensure the "parallel" batch axis has at
            # least 2 grid steps so both cores get work (harmless on 1 TC).
            tb = max(sub, _round_up(pl.cdiv(B, 2), sub))

    num_tiles = pl.cdiv(B, tb)
    mask_rows = (B % tb) != 0

    cost = pl.CostEstimate(
        flops=10 * B * C,
        transcendentals=2 * B * C,
        bytes_accessed=2 * B * C * itemsize + num_tiles * 8 * 128 * 4,
    )

    # TODO(synk): for vocab-scale C, tile the class axis with an online-softmax
    # accumulation instead of requiring the full class axis in one block.
    partials = pl.pallas_call(
        functools.partial(
            _distill_kl_kernel,
            inv_T=1.0 / float(T),
            batch=B,
            block_rows=tb,
            mask_rows=mask_rows,
        ),
        out_shape=jax.ShapeDtypeStruct((num_tiles, 8, 128), jnp.float32),
        grid=(num_tiles,),
        in_specs=[
            pl.BlockSpec((tb, C), lambda i: (i, 0)),
            pl.BlockSpec((tb, C), lambda i: (i, 0)),
        ],
        out_specs=pl.BlockSpec((1, 8, 128), lambda i: (i, 0, 0)),
        compiler_params=pltpu.CompilerParams(
            dimension_semantics=("parallel",),
            vmem_limit_bytes=vmem_limit_bytes,
        ),
        cost_estimate=cost,
    )(y_s, y_t)

    # Tiny final reduction and constant scaling in plain JAX (divide by the
    # true batch size).
    return jnp.sum(partials[:, 0, 0]) * (float(T) * float(T) / B)


def _reference(y_s, y_t, T):
    ys = y_s.astype(jnp.float32) / T
    yt = y_t.astype(jnp.float32) / T
    log_p_s = jax.nn.log_softmax(ys, axis=1)
    log_p_t = jax.nn.log_softmax(yt, axis=1)
    p_t = jnp.exp(log_p_t)
    kl = jnp.sum(p_t * (log_p_t - log_p_s))
    return kl * T * T / y_s.shape[0]


if __name__ == "__main__":
    T = 4.0
    key = jax.random.PRNGKey(0)
    k1, k2, k3, k4, k5, k6 = jax.random.split(key, 6)

    # Case 1: lane-aligned f32 logits, single tile.
    y_s = jax.random.normal(k1, (8, 128), dtype=jnp.float32)
    y_t = jax.random.normal(k2, (8, 128), dtype=jnp.float32)
    loss = jax.block_until_ready(distill_kl(y_s, y_t, T))
    ref = _reference(y_s, y_t, T)
    assert jnp.allclose(loss, ref, rtol=1e-5, atol=1e-5), (loss, ref)

    # Case 2: batch not a multiple of the tile -> multi-tile parallel grid
    # with in-kernel masking of the last partial tile (no HBM padding copies).
    y_s2 = jax.random.normal(k3, (20, 96), dtype=jnp.float32)
    y_t2 = jax.random.normal(k4, (20, 96), dtype=jnp.float32)
    loss2 = jax.block_until_ready(distill_kl(y_s2, y_t2, T, block_rows=8))
    ref2 = _reference(y_s2, y_t2, T)
    assert jnp.allclose(loss2, ref2, rtol=1e-5, atol=1e-5), (loss2, ref2)

    # Case 3: bf16 logits (half the HBM read traffic), 16-row sublane tiles,
    # and the forced >=2-tile split for v7x's two TensorCores.
    y_s3 = jax.random.normal(k5, (32, 160), dtype=jnp.float32).astype(jnp.bfloat16)
    y_t3 = jax.random.normal(k6, (32, 160), dtype=jnp.float32).astype(jnp.bfloat16)
    loss3 = jax.block_until_ready(distill_kl(y_s3, y_t3, T))
    ref3 = _reference(y_s3, y_t3, T)
    assert jnp.allclose(loss3, ref3, rtol=1e-3, atol=1e-3), (loss3, ref3)

    print("KERNEL_OK")
</pallas_src>

<mosaic_0001>
module attributes {stable_mosaic.version = 11 : i64} {
  func.func @_distill_kl_kernel(%arg0: i32, %arg1: memref<8x128xf32, #tpu.memory_space<vmem>>, %arg2: memref<8x128xf32, #tpu.memory_space<vmem>>, %arg3: memref<1x8x128xf32, #tpu.memory_space<vmem>>) attributes {dimension_semantics = [#tpu.dimension_semantics<parallel>], iteration_bounds = array<i64: 1>, scalar_prefetch = 0 : i64, scratch_operands = 0 : i64, tpu.core_type = #tpu.core_type<tc>, window_params = [{transform_indices = @transform_0, window_bounds = array<i64: 8, 128>}, {transform_indices = @transform_1, window_bounds = array<i64: 8, 128>}, {transform_indices = @transform_2, window_bounds = array<i64: 1, 8, 128>}]} {
    %c0 = arith.constant 0 : index
    %c0_0 = arith.constant 0 : index
    %0 = vector.load %arg1[%c0, %c0_0] : memref<8x128xf32, #tpu.memory_space<vmem>>, vector<8x128xf32>
    %cst = arith.constant 2.500000e-01 : f32
    %1 = vector.broadcast %cst : f32 to vector<8x128xf32>
    %2 = arith.mulf %0, %1 : vector<8x128xf32>
    %c0_1 = arith.constant 0 : index
    %c0_2 = arith.constant 0 : index
    %3 = vector.load %arg2[%c0_1, %c0_2] : memref<8x128xf32, #tpu.memory_space<vmem>>, vector<8x128xf32>
    %cst_3 = arith.constant 2.500000e-01 : f32
    %4 = vector.broadcast %cst_3 : f32 to vector<8x128xf32>
    %5 = arith.mulf %3, %4 : vector<8x128xf32>
    %cst_4 = arith.constant dense<0xFF800000> : vector<8xf32>
    %6 = vector.multi_reduction <maximumf>, %2, %cst_4 [1] : vector<8x128xf32> to vector<8xf32>
    %7 = vector.shape_cast %6 : vector<8xf32> to vector<8x1xf32>
    %cst_5 = arith.constant dense<0xFF800000> : vector<8xf32>
    %8 = vector.multi_reduction <maximumf>, %5, %cst_5 [1] : vector<8x128xf32> to vector<8xf32>
    %9 = vector.shape_cast %8 : vector<8xf32> to vector<8x1xf32>
    %10 = vector.broadcast %7 : vector<8x1xf32> to vector<8x128xf32>
    %11 = arith.subf %2, %10 : vector<8x128xf32>
    %12 = math.exp %11 : vector<8x128xf32>
    %13 = vector.broadcast %9 : vector<8x1xf32> to vector<8x128xf32>
    %14 = arith.subf %5, %13 : vector<8x128xf32>
    %15 = math.exp %14 : vector<8x128xf32>
    %cst_6 = arith.constant dense<0.000000e+00> : vector<8xf32>
    %16 = vector.multi_reduction <add>, %12, %cst_6 [1] : vector<8x128xf32> to vector<8xf32>
    %17 = vector.shape_cast %16 : vector<8xf32> to vector<8x1xf32>
    %cst_7 = arith.constant dense<0.000000e+00> : vector<8xf32>
    %18 = vector.multi_reduction <add>, %15, %cst_7 [1] : vector<8x128xf32> to vector<8xf32>
    %19 = vector.shape_cast %18 : vector<8xf32> to vector<8x1xf32>
    %20 = arith.subf %7, %9 : vector<8x1xf32>
    %21 = math.log %17 : vector<8x1xf32>
    %22 = math.log %19 : vector<8x1xf32>
    %23 = arith.subf %21, %22 : vector<8x1xf32>
    %24 = arith.addf %20, %23 : vector<8x1xf32>
    %25 = arith.subf %5, %2 : vector<8x128xf32>
    %26 = vector.broadcast %24 : vector<8x1xf32> to vector<8x128xf32>
    %27 = arith.addf %25, %26 : vector<8x128xf32>
    %28 = arith.mulf %15, %27 : vector<8x128xf32>
    %cst_8 = arith.constant dense<0.000000e+00> : vector<8xf32>
    %29 = vector.multi_reduction <add>, %28, %cst_8 [1] : vector<8x128xf32> to vector<8xf32>
    %30 = vector.shape_cast %29 : vector<8xf32> to vector<8x1xf32>
    %31 = tpu.reciprocal %19 : vector<8x1xf32> -> vector<8x1xf32>
    %32 = arith.mulf %30, %31 : vector<8x1xf32>
    %33 = vector.shape_cast %32 : vector<8x1xf32> to vector<1x8x1xf32>
    %cst_9 = arith.constant dense<0.000000e+00> : vector<1xf32>
    %34 = vector.multi_reduction <add>, %33, %cst_9 [1, 2] : vector<1x8x1xf32> to vector<1xf32>
    %35 = vector.shape_cast %34 : vector<1xf32> to vector<1x1x1xf32>
    %36 = vector.extract %35[0, 0, 0] : f32 from vector<1x1x1xf32>
    %37 = vector.broadcast %36 : f32 to vector<1x8x128xf32>
    %c0_10 = arith.constant 0 : index
    %c0_11 = arith.constant 0 : index
    %c0_12 = arith.constant 0 : index
    %38 = vector.load %arg3[%c0_10, %c0_11, %c0_12] : memref<1x8x128xf32, #tpu.memory_space<vmem>>, vector<1x8x128xf32>
    tpu.vector_store %arg3[%c0_10, %c0_11, %c0_12], %37 {strides = array<i32>} : memref<1x8x128xf32, #tpu.memory_space<vmem>>, vector<1x8x128xf32>,
    return
  }
  func.func @transform_0(%arg0: i32) -> (i32, i32) {
    %c0_i32 = arith.constant 0 : i32
    %c0_i32_0 = arith.constant 0 : i32
    return %arg0, %c0_i32 : i32, i32
  }
  func.func @transform_1(%arg0: i32) -> (i32, i32) {
    %c0_i32 = arith.constant 0 : i32
    %c0_i32_0 = arith.constant 0 : i32
    return %arg0, %c0_i32 : i32, i32
  }
  func.func @transform_2(%arg0: i32) -> (i32, i32, i32) {
    %c0_i32 = arith.constant 0 : i32
    %c0_i32_0 = arith.constant 0 : i32
    %c0_i32_1 = arith.constant 0 : i32
    return %arg0, %c0_i32, %c0_i32_0 : i32, i32, i32
  }
}

</mosaic_0001>

<llo_original>
// kernel: tpu_custom_call.1
$region0: #{tpu_custom_call.1}
  #allocation0 [shape = 'u32[]', space=smem, size = 0x4, offset = 0x4, fixed_abs, tag = 'smem constant byte address 0x4 - core index']
  #allocation1 [shape = 'u32[144,128]{1,0:T(1,128)}', space=vmem, size = 0x12000, scoped, tag = 'internal scratch']
  %s0 = inlined_call_operand.hbm [shape: f32[8,128], index: 0, kind: input, shape index: {}]
  %s1 = inlined_call_operand.hbm [shape: f32[8,128], index: 1, kind: input, shape index: {}]
  %s2 = inlined_call_operand.hbm [shape: f32[1,8,128], index: 2, kind: output, shape index: {}]
  %s3 = sld [smem:[#allocation0]]
  $region26: #{tpu_custom_call.1} parent=0
    _
  %s5 = ssub.s32 1, %s3
  %s6 = scalar_select 0, %s5, %s3
  $region1: #{tpu_custom_call.1} parent=0
    #allocation2 [shape = 'u8[4096]{0}', space=vmem, size = 0x1000, scoped, tag = 'input window, operand 0, single buffered']
    #allocation3 [shape = 's32[1]{0}', space=sflag, size = 0x4, scoped, tag = 'scoped memory for tpu_custom_call.1']
    #allocation4 [shape = 's32[1]{0}', space=sflag, size = 0x4, scoped, tag = 'scoped memory for tpu_custom_call.1']
    #allocation5 [shape = 'u8[4096]{0}', space=vmem, size = 0x1000, scoped, tag = 'input window, operand 1, single buffered']
    #allocation6 [shape = 's32[1]{0}', space=sflag, size = 0x4, scoped, tag = 'scoped memory for tpu_custom_call.1']
    #allocation7 [shape = 'u8[4096]{0}', space=vmem, size = 0x1000, scoped, tag = 'output window, operand 0, single buffered']
    %7 = vsyncpa [#allocation3], 0
    %8 = vsyncpa [#allocation6], 0
    %9 = vsyncpa [#allocation4], 0
    // Predicated region
    $region2: #{tpu_custom_call.1} parent=1 // pred_check
      _
    $region3: #{tpu_custom_call.1} parent=1 // pred_check_branch
      %11 = sbr.rel (0) target = $region5
    $region4: #{tpu_custom_call.1} parent=1 // pred_region
      %s13 = ssub.s32 128, 128
      %14 = vsyncadd [#allocation3], %s13
      %s16 = sshll.u32 [#allocation2], 4
      %s17 = int_to_ptr.vmem [resolvable:$true] %s16
      %19 = dma.hbm_to_vmem [thread:$0]  %s0, 128, %s17, [#allocation3]
    $region5: #{tpu_custom_call.1} parent=1 // pred_fallthru
      _
    // Predicated region
    $region6: #{tpu_custom_call.1} parent=1 // pred_check
      _
    $region7: #{tpu_custom_call.1} parent=1 // pred_check_branch
      %21 = sbr.rel (0) target = $region9
    $region8: #{tpu_custom_call.1} parent=1 // pred_region
      %s23 = ssub.s32 128, 128
      %24 = vsyncadd [#allocation6], %s23
      %s26 = sshll.u32 [#allocation5], 4
      %s27 = int_to_ptr.vmem [resolvable:$true] %s26
      %29 = dma.hbm_to_vmem [thread:$0]  %s1, 128, %s27, [#allocation6]
    $region9: #{tpu_custom_call.1} parent=1 // pred_fallthru
      _
    // Predicated region
    $region10: #{tpu_custom_call.1} parent=1 // pred_check
      _
    $region11: #{tpu_custom_call.1} parent=1 // pred_check_branch
      %31 = sbr.rel (0) target = $region13
    $region12: #{tpu_custom_call.1} parent=1 // pred_region
      %32 = dma.done [#allocation3], 128
    $region13: #{tpu_custom_call.1} parent=1 // pred_fallthru
      _
    // Predicated region
    $region14: #{tpu_custom_call.1} parent=1 // pred_check
      _
    $region15: #{tpu_custom_call.1} parent=1 // pred_check_branch
      %34 = sbr.rel (0) target = $region17
    $region16: #{tpu_custom_call.1} parent=1 // pred_region
      %35 = dma.done [#allocation6], 128
    $region17: #{tpu_custom_call.1} parent=1 // pred_fallthru
      _
    %v36 = vld [vmem:[#allocation2] sm:$0xff]
    %v37 = vmul.f32 %v36, 0.25
    %v38 = vld [vmem:[#allocation5] sm:$0xff]
    %v39 = vmul.f32 %v38, 0.25
    %40 = vmax.xlane.f32.xlu0 %v37
    %v41 = vpop.xlane.xlu0 %40
    %42 = vmax.xlane.f32.xlu0 %v39
    %v43 = vpop.xlane.xlu0 %42
    %v44 = vsub.f32 %v37, %v41
    %v45 = vmul.f32 %v44, 1.442695
    %v46 = vpow.pop %v45
    %v47 = vsub.f32 %v39, %v43
    %v48 = vmul.f32 %v47, 1.442695
    %v49 = vpow.pop %v48
    %50 = vadd.xlane.f32.xlu0 %v46
    %v51 = vpop.xlane.xlu0 %50
    %52 = vadd.xlane.f32.xlu0 %v49
    %v53 = vpop.xlane.xlu0 %52
    %v54 = vsub.f32 %v41, %v43
    %v55 = vlog2.pop %v51
    %v56 = vmul.f32 %v55, 0.6931472
    %v57 = vlog2.pop %v53
    %v58 = vmul.f32 %v57, 0.6931472
    %v59 = vsub.f32 %v56, %v58
    %v60 = vadd.f32 %v54, %v59
    %v61 = vsub.f32 %v39, %v37
    %v62 = vadd.f32 %v61, %v60
    %v63 = vmul.f32 %v49, %v62
    %64 = vadd.xlane.f32.xlu0 %v63
    %v65 = vpop.xlane.xlu0 %64
    %v66 = vrcp.pop %v53
    %v67 = vmul.f32 %v65, %v66
    %vm68 = vcmask 7168
    %v69 = vsel %vm68, %v67, 0.0
    %70 = vadd.xlane.f32.xlu0 %v69
    %v71 = vpop.xlane.xlu0 %70
    %v72 = vrot.slane %v71, 4
    %v73 = vadd.f32 %v71, %v72
    %v74 = vrot.slane %v73, 2
    %v75 = vadd.f32 %v73, %v74
    %v76 = vrot.slane %v75, 1
    %v77 = vadd.f32 %v75, %v76
    %s78 = vtos %v77
    %v79 = vstv %s78
    %80 = vst [vmem:[#allocation7] sm:$0xff] %v79
    // Predicated region
    $region18: #{tpu_custom_call.1} parent=1 // pred_check
      _
    $region19: #{tpu_custom_call.1} parent=1 // pred_check_branch
      %82 = sbr.rel (0) target = $region21
    $region20: #{tpu_custom_call.1} parent=1 // pred_region
      %s84 = ssub.s32 128, 128
      %85 = vsyncadd [#allocation4], %s84
      %s87 = sshll.u32 [#allocation7], 4
      %s88 = int_to_ptr.vmem [resolvable:$true] %s87
      %90 = dma.vmem_to_hbm [thread:$0]  %s88, 128, %s2, [#allocation4]
    $region21: #{tpu_custom_call.1} parent=1 // pred_fallthru
      _
    // Predicated region
    $region22: #{tpu_custom_call.1} parent=1 // pred_check
      _
    $region23: #{tpu_custom_call.1} parent=1 // pred_check_branch
      %92 = sbr.rel (0) target = $region25
    $region24: #{tpu_custom_call.1} parent=1 // pred_region
      %93 = dma.done [#allocation4], 128
    $region25: #{tpu_custom_call.1} parent=1 // pred_fallthru
      _
    %94 = vsyncpa [#allocation3], 1
    %95 = vsyncpa [#allocation6], 1
    %96 = vsyncpa [#allocation4], 1

</llo_original>
